<compile_context>
chip_gen: v7x
topology: tpu7x:2x2x1
jax: 0.10.0
libtpu: 0.0.40
codegen_flags: <defaults>
</compile_context>

<pallas_src>
import numpy as np
import jax
import jax.numpy as jnp
from jax.experimental import pallas as pl
from jax.experimental.pallas import tpu as pltpu


def net_kernel(x_ref, w_ref, b_ref, o_ref):
    # x_ref: [TBR, 128]  8 samples per row, 16 raw input values each
    # w_ref: [128, 16]   block-diagonal fused (pad ∘ conv ∘ linear) weight
    # b_ref: [1, 16]     fused bias (pad + conv_b + lin_b terms), tiled 8x
    # o_ref: [TBR, 16]   8 samples per row, 2 outputs each
    o = jnp.dot(x_ref[...], w_ref[...], preferred_element_type=jnp.float32)
    o_ref[...] = (o + b_ref[...]).astype(o_ref.dtype)


def _pad_conv_selector():
    """[36, 17] constant mapping [x_flat(16); 1] -> the 36 im2col entries of the
    ConstantPad2d(1, value=1)'d 6x6 image read by Conv2d(k=2, s=2)."""
    M = np.zeros((36, 17), dtype=np.float32)
    for oy in range(3):
        for ox in range(3):
            for ky in range(2):
                for kx in range(2):
                    r, c = 2 * oy + ky, 2 * ox + kx            # padded coords
                    row = (oy * 3 + ox) * 4 + (ky * 2 + kx)
                    if 1 <= r <= 4 and 1 <= c <= 4:
                        M[row, (r - 1) * 4 + (c - 1)] = 1.0    # interior -> x
                    else:
                        M[row, 16] = 1.0                       # pad -> constant 1.0
    return M


def net_forward(x, conv_w, conv_b, lin_w, lin_b, *, tbr_max=8192):
    """x: [B, 1, 4, 4] float32; returns [B, 2] float32."""
    B = x.shape[0]
    assert x.shape == (B, 1, 4, 4)
    f32 = jnp.float32

    # --- fuse pad + conv + linear into one affine map over the raw 16 inputs ---
    # conv:   h[p] = sum_t patches[p*4+t] * w_flat[t] + conv_b
    # linear: o[j] = sum_p h[p] * lin_w[j,p] + lin_b[j]
    # pad:    20 of the 36 patch entries are the constant 1.0 -> pure bias.
    w_flat = conv_w.reshape(4).astype(f32)                         # taps t = ky*2+kx
    wl = lin_w.astype(f32)                                         # [2, 9]
    w36 = (wl[:, :, None] * w_flat[None, None, :]).reshape(2, 36)  # [2, 36]
    aug = w36 @ jnp.asarray(_pad_conv_selector())                  # [2, 17]
    w16 = aug[:, :16]                                              # [2, 16]
    bias2 = aug[:, 16] + conv_b[0] * wl.sum(axis=1) + lin_b.astype(f32)   # [2]

    # Block-diagonal weight so 8 samples ride on one 128-lane row.
    w_bd = jnp.kron(jnp.eye(8, dtype=f32), w16.T)                  # [128, 16]
    b_bd = jnp.tile(bias2, 8).reshape(1, 16)                       # [1, 16]

    # --- zero-copy lane-dense packing: [B,1,4,4] -> [B,16] -> [rows,128] ---
    x_flat = x.reshape(B, 16).astype(f32)
    B8 = pl.cdiv(B, 8) * 8
    if B8 != B:
        # pad x (64 B/row, <= 7 rows) -- never the larger derived arrays
        x_flat = jnp.pad(x_flat, ((0, B8 - B), (0, 0)))
    rows = B8 // 8
    xr = x_flat.reshape(rows, 128)                                 # contiguous view

    # --- batch tiling: single full block when small; otherwise 8192-row tiles
    # (~4 MiB f32) with a ragged last block (no jnp.pad of the streamed data) ---
    tbr = rows if rows <= tbr_max else tbr_max
    grid = (pl.cdiv(rows, tbr),)

    out_packed = pl.pallas_call(
        net_kernel,
        out_shape=jax.ShapeDtypeStruct((rows, 16), f32),
        grid=grid,
        in_specs=[
            pl.BlockSpec((tbr, 128), lambda i: (i, 0)),   # streamed batch tiles
            pl.BlockSpec((128, 16), lambda i: (0, 0)),    # resident fused weight
            pl.BlockSpec((1, 16), lambda i: (0, 0)),      # resident fused bias
        ],
        out_specs=pl.BlockSpec((tbr, 16), lambda i: (i, 0)),
        compiler_params=pltpu.CompilerParams(
            dimension_semantics=("parallel",)),           # shard tiles on v7x's 2 TCs
        cost_estimate=pl.CostEstimate(
            flops=2 * rows * 128 * 16,
            transcendentals=0,
            bytes_accessed=rows * (128 + 16) * 4 + (128 * 16 + 16) * 4),
    )(xr, w_bd, b_bd)

    # --- zero-copy unpack: [rows,16] -> [B8,2] -> [B,2] ---
    return out_packed.reshape(B8, 2)[:B]


def net_reference(x, conv_w, conv_b, lin_w, lin_b):
    """Pure-JAX reference of the PyTorch forward pass."""
    B = x.shape[0]
    xp = jnp.pad(x[:, 0], ((0, 0), (1, 1), (1, 1)), constant_values=1.0)  # [B,6,6]
    w = conv_w.reshape(2, 2)
    conv = (xp[:, 0::2, 0::2] * w[0, 0] + xp[:, 0::2, 1::2] * w[0, 1]
            + xp[:, 1::2, 0::2] * w[1, 0] + xp[:, 1::2, 1::2] * w[1, 1]
            + conv_b[0])                                                   # [B,3,3]
    return conv.reshape(B, 9) @ lin_w.T + lin_b


if __name__ == "__main__":
    key = jax.random.PRNGKey(0)
    k_x, k_cw, k_cb, k_lw, k_lb = jax.random.split(key, 5)

    # Deterministic synthetic parameters (shapes match the PyTorch module).
    conv_w = 0.1 * jax.random.normal(k_cw, (1, 1, 2, 2), dtype=jnp.float32)
    conv_b = 0.1 * jax.random.normal(k_cb, (1,), dtype=jnp.float32)
    lin_w = 0.1 * jax.random.normal(k_lw, (2, 9), dtype=jnp.float32)
    lin_b = 0.1 * jax.random.normal(k_lb, (2,), dtype=jnp.float32)

    # Small test batch; the module implies [B, 1, 4, 4] inputs
    # (pad -> 6x6, conv k=2 s=2 -> 3x3 -> 9 features for Linear(9, 2)).
    B = 2
    x = jax.random.normal(k_x, (B, 1, 4, 4), dtype=jnp.float32)
    out = jax.block_until_ready(net_forward(x, conv_w, conv_b, lin_w, lin_b))
    ref = net_reference(x, conv_w, conv_b, lin_w, lin_b)
    assert out.shape == (B, 2)
    assert jnp.allclose(out, ref, atol=1e-5, rtol=1e-5), (out, ref)

    # Multiple-of-8 batch, still a single tile.
    B2 = 64
    x2 = jax.random.normal(k_x, (B2, 1, 4, 4), dtype=jnp.float32)
    out2 = jax.block_until_ready(net_forward(x2, conv_w, conv_b, lin_w, lin_b))
    ref2 = net_reference(x2, conv_w, conv_b, lin_w, lin_b)
    assert jnp.allclose(out2, ref2, atol=1e-5, rtol=1e-5)

    # Exercise the multi-step grid + ragged last block path with a tiny tile.
    B3 = 1000
    x3 = jax.random.normal(k_x, (B3, 1, 4, 4), dtype=jnp.float32)
    out3 = jax.block_until_ready(
        net_forward(x3, conv_w, conv_b, lin_w, lin_b, tbr_max=16))
    ref3 = net_reference(x3, conv_w, conv_b, lin_w, lin_b)
    assert jnp.allclose(out3, ref3, atol=1e-5, rtol=1e-5)

    print("KERNEL_OK")
</pallas_src>

<mosaic_0001>
module attributes {stable_mosaic.version = 11 : i64} {
  func.func @net_kernel(%arg0: i32, %arg1: memref<1x128xf32, #tpu.memory_space<vmem>>, %arg2: memref<128x16xf32, #tpu.memory_space<vmem>>, %arg3: memref<1x16xf32, #tpu.memory_space<vmem>>, %arg4: memref<1x16xf32, #tpu.memory_space<vmem>>) attributes {dimension_semantics = [#tpu.dimension_semantics<parallel>], iteration_bounds = array<i64: 1>, scalar_prefetch = 0 : i64, scratch_operands = 0 : i64, tpu.core_type = #tpu.core_type<tc>, window_params = [{transform_indices = @transform_0, window_bounds = array<i64: 1, 128>}, {pipeline_mode = #tpu.pipeline_mode<synchronous>, transform_indices = @transform_1, window_bounds = array<i64: 128, 16>}, {pipeline_mode = #tpu.pipeline_mode<synchronous>, transform_indices = @transform_2, window_bounds = array<i64: 1, 16>}, {transform_indices = @transform_3, window_bounds = array<i64: 1, 16>}]} {
    %c0 = arith.constant 0 : index
    %c0_0 = arith.constant 0 : index
    %0 = vector.load %arg1[%c0, %c0_0] : memref<1x128xf32, #tpu.memory_space<vmem>>, vector<1x128xf32>
    %c0_1 = arith.constant 0 : index
    %c0_2 = arith.constant 0 : index
    %1 = vector.load %arg2[%c0_1, %c0_2] : memref<128x16xf32, #tpu.memory_space<vmem>>, vector<128x16xf32>
    %cst = arith.constant dense<0.000000e+00> : vector<1x16xf32>
    %2 = tpu.matmul %0, %1, %cst {dimension_numbers = #tpu.dot_dimension_numbers<[1], [0], [0], [1], [0, 0, 1, 1], [], []>} : vector<1x128xf32>, vector<128x16xf32>, vector<1x16xf32> -> vector<1x16xf32>
    %c0_3 = arith.constant 0 : index
    %c0_4 = arith.constant 0 : index
    %3 = vector.load %arg3[%c0_3, %c0_4] : memref<1x16xf32, #tpu.memory_space<vmem>>, vector<1x16xf32>
    %4 = arith.addf %2, %3 : vector<1x16xf32>
    %c0_5 = arith.constant 0 : index
    %c0_6 = arith.constant 0 : index
    %5 = vector.load %arg4[%c0_5, %c0_6] : memref<1x16xf32, #tpu.memory_space<vmem>>, vector<1x16xf32>
    tpu.vector_store %arg4[%c0_5, %c0_6], %4 {strides = array<i32>} : memref<1x16xf32, #tpu.memory_space<vmem>>, vector<1x16xf32>,
    return
  }
  func.func @transform_0(%arg0: i32) -> (i32, i32) {
    %c0_i32 = arith.constant 0 : i32
    %c0_i32_0 = arith.constant 0 : i32
    return %arg0, %c0_i32 : i32, i32
  }
  func.func @transform_1(%arg0: i32) -> (i32, i32) {
    %c0_i32 = arith.constant 0 : i32
    %c0_i32_0 = arith.constant 0 : i32
    %c0_i32_1 = arith.constant 0 : i32
    return %c0_i32, %c0_i32_0 : i32, i32
  }
  func.func @transform_2(%arg0: i32) -> (i32, i32) {
    %c0_i32 = arith.constant 0 : i32
    %c0_i32_0 = arith.constant 0 : i32
    %c0_i32_1 = arith.constant 0 : i32
    return %c0_i32, %c0_i32_0 : i32, i32
  }
  func.func @transform_3(%arg0: i32) -> (i32, i32) {
    %c0_i32 = arith.constant 0 : i32
    %c0_i32_0 = arith.constant 0 : i32
    return %arg0, %c0_i32 : i32, i32
  }
}

</mosaic_0001>

<llo_original>
// kernel: tpu_custom_call.1
$region0: #{tpu_custom_call.1}
  #allocation0 [shape = 'u32[]', space=smem, size = 0x4, offset = 0x4, fixed_abs, tag = 'smem constant byte address 0x4 - core index']
  #allocation1 [shape = 'u32[144,128]{1,0:T(1,128)}', space=vmem, size = 0x12000, scoped, tag = 'internal scratch']
  %s0 = inlined_call_operand.vmem [shape: f32[1,128], index: 0, kind: input, shape index: {}]
  %s1 = inlined_call_operand.vmem [shape: f32[128,16], index: 1, kind: input, shape index: {}]
  %s2 = inlined_call_operand.vmem [shape: f32[1,16], index: 2, kind: input, shape index: {}]
  %s3 = inlined_call_operand.hbm [shape: f32[1,16], index: 3, kind: output, shape index: {}]
  %s4 = sld [smem:[#allocation0]]
  $region22: #{tpu_custom_call.1} parent=0
    _
  %s6 = ssub.s32 1, %s4
  %s7 = scalar_select 0, %s6, %s4
  $region1: #{tpu_custom_call.1} parent=0
    #allocation2 [shape = 'u8[512]{0}', space=vmem, size = 0x400, scoped, tag = 'output window, operand 0, single buffered']
    #allocation3 [shape = 's32[1]{0}', space=sflag, size = 0x4, scoped, tag = 'scoped memory for tpu_custom_call.1']
    %8 = vsyncpa [#allocation3], 0
    // Predicated region
    $region2: #{tpu_custom_call.1} parent=1 // pred_check
      _
    $region3: #{tpu_custom_call.1} parent=1 // pred_check_branch
      %10 = sbr.rel (0) target = $region5
    $region4: #{tpu_custom_call.1} parent=1 // pred_region
      _
    $region5: #{tpu_custom_call.1} parent=1 // pred_fallthru
      _
    // Predicated region
    $region6: #{tpu_custom_call.1} parent=1 // pred_check
      _
    $region7: #{tpu_custom_call.1} parent=1 // pred_check_branch
      %12 = sbr.rel (0) target = $region9
    $region8: #{tpu_custom_call.1} parent=1 // pred_region
      _
    $region9: #{tpu_custom_call.1} parent=1 // pred_fallthru
      _
    // Predicated region
    $region10: #{tpu_custom_call.1} parent=1 // pred_check
      _
    $region11: #{tpu_custom_call.1} parent=1 // pred_check_branch
      %14 = sbr.rel (0) target = $region13
    $region12: #{tpu_custom_call.1} parent=1 // pred_region
      _
    $region13: #{tpu_custom_call.1} parent=1 // pred_fallthru
      _
    %v15 = vld [vmem:[%s0] sm:$0x1]
    %v16 = vld [vmem:[%s1] sm:$0xff]
    %v17 = vld [vmem:[%s1 + $0x8] sm:$0xff]
    %v18 = vld [vmem:[%s1 + $0x10] sm:$0xff]
    %v19 = vld [vmem:[%s1 + $0x18] sm:$0xff]
    %v20 = vld [vmem:[%s1 + $0x20] sm:$0xff]
    %v21 = vld [vmem:[%s1 + $0x28] sm:$0xff]
    %v22 = vld [vmem:[%s1 + $0x30] sm:$0xff]
    %v23 = vld [vmem:[%s1 + $0x38] sm:$0xff]
    %v24 = vld [vmem:[%s1 + $0x40] sm:$0xff]
    %v25 = vld [vmem:[%s1 + $0x48] sm:$0xff]
    %v26 = vld [vmem:[%s1 + $0x50] sm:$0xff]
    %v27 = vld [vmem:[%s1 + $0x58] sm:$0xff]
    %v28 = vld [vmem:[%s1 + $0x60] sm:$0xff]
    %v29 = vld [vmem:[%s1 + $0x68] sm:$0xff]
    %v30 = vld [vmem:[%s1 + $0x70] sm:$0xff]
    %v31 = vld [vmem:[%s1 + $0x78] sm:$0xff]
    %v32 = vld [vmem:[%s2] sm:$0x1]
    %33 = vmatprep.subr.mxu0 0.0
    %34 = vmatpush1.msra.mxu0 %v16
    %35 = vmatprep.subr.mxu0 0.0
    %36 = vmatpush1.msra.mxu0 %v17
    %37 = vmatprep.subr.mxu0 0.0
    %38 = vmatpush1.msra.mxu0 %v18
    %39 = vmatprep.subr.mxu0 0.0
    %40 = vmatpush1.msra.mxu0 %v19
    %41 = vmatprep.subr.mxu0 0.0
    %42 = vmatpush1.msra.mxu0 %v20
    %43 = vmatprep.subr.mxu0 0.0
    %44 = vmatpush1.msra.mxu0 %v21
    %45 = vmatprep.subr.mxu0 0.0
    %46 = vmatpush1.msra.mxu0 %v22
    %47 = vmatprep.subr.mxu0 0.0
    %48 = vmatpush1.msra.mxu0 %v23
    %49 = vmatprep.subr.mxu0 0.0
    %50 = vmatpush1.msra.mxu0 %v24
    %51 = vmatprep.subr.mxu0 0.0
    %52 = vmatpush1.msra.mxu0 %v25
    %53 = vmatprep.subr.mxu0 0.0
    %54 = vmatpush1.msra.mxu0 %v26
    %55 = vmatprep.subr.mxu0 0.0
    %56 = vmatpush1.msra.mxu0 %v27
    %57 = vmatprep.subr.mxu0 0.0
    %58 = vmatpush1.msra.mxu0 %v28
    %59 = vmatprep.subr.mxu0 0.0
    %60 = vmatpush1.msra.mxu0 %v29
    %61 = vmatprep.subr.mxu0 0.0
    %62 = vmatpush1.msra.mxu0 %v30
    %63 = vmatprep.subr.mxu0 0.0
    %64 = vmatpush1.msra.mxu0 %v31
    %65 = vmatprep.subr.mxu0 0.0
    %66 = vmatpush1.msra.mxu0 0.0
    %67 = vmatprep.subr.mxu0 0.0
    %68 = vmatpush1.msra.mxu0 0.0
    %69 = vmatprep.subr.mxu0 0.0
    %70 = vmatpush1.msra.mxu0 0.0
    %71 = vmatprep.subr.mxu0 0.0
    %72 = vmatpush1.msra.mxu0 0.0
    %73 = vmatprep.subr.mxu0 0.0
    %74 = vmatpush1.msra.mxu0 0.0
    %75 = vmatprep.subr.mxu0 0.0
    %76 = vmatpush1.msra.mxu0 0.0
    %77 = vmatprep.subr.mxu0 0.0
    %78 = vmatpush1.msra.mxu0 0.0
    %79 = vmatprep.subr.mxu0 0.0
    %80 = vmatpush1.msra.mxu0 0.0
    %81 = vmatprep.subr.mxu0 0.0
    %82 = vmatpush1.msra.mxu0 0.0
    %83 = vmatprep.subr.mxu0 0.0
    %84 = vmatpush1.msra.mxu0 0.0
    %85 = vmatprep.subr.mxu0 0.0
    %86 = vmatpush1.msra.mxu0 0.0
    %87 = vmatprep.subr.mxu0 0.0
    %88 = vmatpush1.msra.mxu0 0.0
    %89 = vmatprep.subr.mxu0 0.0
    %90 = vmatpush1.msra.mxu0 0.0
    %91 = vmatprep.subr.mxu0 0.0
    %92 = vmatpush1.msra.mxu0 0.0
    %93 = vmatprep.subr.mxu0 0.0
    %94 = vmatpush1.msra.mxu0 0.0
    %95 = vmatprep.subr.mxu0 0.0
    %96 = vmatpush1.msra.mxu0 0.0
    %97 = vmatprep.mubr.f32.mxu0 0.0
    %98 = vmatmul.mubr.f32.gmra.mrb[0].mxu0 %v15
    %v99 = vpop.f32.mrb[0].mxu0
    %v100 = vadd.f32 %v32, %v99
    %v101 = vpop.f32.mrb[0].mxu0
    %102 = vdwg.mxu0
    %vm103 = vcmask 122880
    %104 = vst.msk [vmem:[#allocation2] sm:$0x1] %vm103, %v100
    // Predicated region
    $region14: #{tpu_custom_call.1} parent=1 // pred_check
      _
    $region15: #{tpu_custom_call.1} parent=1 // pred_check_branch
      %106 = sbr.rel (0) target = $region17
    $region16: #{tpu_custom_call.1} parent=1 // pred_region
      %s108 = ssub.s32 16, 16
      %109 = vsyncadd [#allocation3], %s108
      %s111 = sshll.u32 [#allocation2], 4
      %s112 = int_to_ptr.vmem [resolvable:$true] %s111
      %114 = dma.vmem_to_hbm [thread:$0]  %s112, 16, %s3, [#allocation3]
    $region17: #{tpu_custom_call.1} parent=1 // pred_fallthru
      _
    // Predicated region
    $region18: #{tpu_custom_call.1} parent=1 // pred_check
      _
    $region19: #{tpu_custom_call.1} parent=1 // pred_check_branch
      %116 = sbr.rel (0) target = $region21
    $region20: #{tpu_custom_call.1} parent=1 // pred_region
      %117 = dma.done [#allocation3], 16
    $region21: #{tpu_custom_call.1} parent=1 // pred_fallthru
      _
    %118 = vsyncpa [#allocation3], 1

</llo_original>
